<compile_context>
chip_gen: v5e
topology: v5e:2x2
jax: 0.10.0
libtpu: 0.0.40
codegen_flags: <defaults>
</compile_context>

<pallas_src>
import functools
import math

import jax
import jax.numpy as jnp
from jax.experimental import pallas as pl
from jax.experimental.pallas import tpu as pltpu

D_IN = 2
H1 = 2 ** 8      # 256
D_MID = 2
H3 = 2 ** 12     # 4096
D_OUT = 1

_dot_hi = functools.partial(jnp.dot, precision=jax.lax.Precision.HIGHEST)


def mlp_b_kernel(xT_ref, w1T_ref, b1T_ref, wfT_ref, bf_ref, o_ref):
    """out_T = wf_T @ relu(W1_T-FMA(x_T) + b1_T) + bf  for one block_m column tile.

    xT_ref : (2, block_m)   VMEM   transposed input tile (lane-dense)
    w1T_ref: (256, 2)       VMEM   W1^T   (grid-resident)
    b1T_ref: (256, 1)       VMEM   b1^T   (grid-resident)
    wfT_ref: (1, 256)       VMEM   (W2 @ W3 @ W4)^T folded (grid-resident)
    bf_ref : (1, 1)         SMEM   folded scalar bias
    o_ref  : (1, block_m)   VMEM   lane-dense output row for this tile
    """
    xT = xT_ref[...]                                    # (2, block_m)

    # fc1 in transposed form as VPU broadcast-FMA (K=2 would waste >99% of the
    # MXU), then ReLU.  h_T[j, m] = W1[0, j]*x[m, 0] + W1[1, j]*x[m, 1] + b1[j]
    hT = (w1T_ref[:, 0:1] * xT[0:1, :]
          + w1T_ref[:, 1:2] * xT[1:2, :]
          + b1T_ref[...])                               # (256, block_m)
    hT = jnp.maximum(hT, 0.0)

    # Folded fc2->fc3->fc4: one (1,256)@(256,block_m) matvec on the MXU.  The
    # result is already lane-dense, so it is stored directly (no relayout).
    out = jnp.dot(wfT_ref[...], hT, preferred_element_type=jnp.float32)
    o_ref[...] = (out + bf_ref[0, 0]).astype(o_ref.dtype)  # (1, block_m)


@functools.partial(jax.jit, static_argnames=("block_m", "fc1_dtype"))
def mlp_b_forward(x, params, *, block_m=512, fc1_dtype=jnp.float32):
    """x: any shape with an even number of elements (matches din.view(-1, 2)).

    fc1_dtype=jnp.bfloat16 is the recommended setting on v6e/v7x (VALU-bound
    fc1, bf16 VPU); keep the f32 default on v5e.
    """
    assert block_m % 128 == 0, "block_m should be a multiple of 128"
    w1, b1, w2, b2, w3, b3, w4, b4 = params

    # din.view(-1, 2)
    x2d = x.reshape(-1, D_IN).astype(jnp.float32)
    n = x2d.shape[0]

    # Exact algebraic fold of the three trailing linear layers:
    #   ((h @ W2 + b2) @ W3 + b3) @ W4 + b4  ==  h @ Wf + bf
    wf = _dot_hi(w2, _dot_hi(w3, w4))                    # (256, 1)
    bf = _dot_hi(_dot_hi(b2, w3) + b3, w4) + b4          # (1, 1) scalar, f32

    # Pad the batch to a multiple of block_m (padded columns sliced off below).
    num_blocks = pl.cdiv(n, block_m)
    n_pad = num_blocks * block_m

    # Transposed, lane-dense dataflow.
    xT = x2d.T                                           # (2, n)
    if n_pad != n:
        xT = jnp.pad(xT, ((0, 0), (0, n_pad - n)))       # (2, n_pad)
    xT = xT.astype(fc1_dtype)
    w1T = w1.T.astype(fc1_dtype)                         # (256, 2)
    b1T = b1.T.astype(fc1_dtype)                         # (256, 1)
    wfT = wf.T.astype(fc1_dtype)                         # (1, 256)

    fixed = lambda i: (0, 0)
    in_specs = [
        pl.BlockSpec((D_IN, block_m), lambda i: (0, i)),       # x_T tile
        pl.BlockSpec((H1, D_IN), fixed),                       # W1^T (resident)
        pl.BlockSpec((H1, 1), fixed),                          # b1^T (resident)
        pl.BlockSpec((1, H1), fixed),                          # folded Wf^T
        pl.BlockSpec(memory_space=pltpu.MemorySpace.SMEM),     # folded bias bf
    ]
    out_spec = pl.BlockSpec((1, block_m), lambda i: (0, i))

    flops = 2 * n_pad * (D_IN * H1 + H1)                 # fc1 + folded matvec
    bytes_accessed = (n_pad * (D_IN + D_OUT) * 4         # stream x in, out
                      + (D_IN * H1 + H1 + H1 + 1) * 4)   # resident weights

    out = pl.pallas_call(
        mlp_b_kernel,
        out_shape=jax.ShapeDtypeStruct((1, n_pad), jnp.float32),
        grid_spec=pltpu.PrefetchScalarGridSpec(
            num_scalar_prefetch=0,
            grid=(num_blocks,),
            in_specs=in_specs,
            out_specs=out_spec,
        ),
        compiler_params=pltpu.CompilerParams(
            dimension_semantics=("parallel",),
            vmem_limit_bytes=32 * 1024 * 1024,
        ),
        cost_estimate=pl.CostEstimate(
            flops=flops, transcendentals=0, bytes_accessed=bytes_accessed),
    )(xT, w1T, b1T, wfT, bf)

    # (1, n_pad) lane-dense -> (n, 1)
    return out.reshape(-1)[:n].reshape(n, D_OUT)


def init_linear(key, fan_in, fan_out):
    """PyTorch nn.Linear default init: U(-1/sqrt(fan_in), 1/sqrt(fan_in)).
    Weight returned as (in, out) = transposed vs. torch's (out, in)."""
    kw, kb = jax.random.split(key)
    bound = 1.0 / math.sqrt(fan_in)
    w = jax.random.uniform(kw, (fan_in, fan_out), jnp.float32, -bound, bound)
    b = jax.random.uniform(kb, (1, fan_out), jnp.float32, -bound, bound)
    return w, b


def reference_forward(x, params):
    """Unfolded reference matching the original PyTorch module."""
    w1, b1, w2, b2, w3, b3, w4, b4 = params
    x2d = x.reshape(-1, D_IN).astype(jnp.float32)
    h = jnp.maximum(_dot_hi(x2d, w1) + b1, 0.0)
    h = _dot_hi(h, w2) + b2
    h = _dot_hi(h, w3) + b3
    return _dot_hi(h, w4) + b4


if __name__ == "__main__":
    key = jax.random.PRNGKey(0)
    kx, k1, k2, k3, k4 = jax.random.split(key, 5)

    # 1000 rows of 2 features: exercises zero-padding (1000 -> 1024) and an
    # even 2-step parallel grid at block_m=512 (both v7x TensorCores busy).
    x = jax.random.normal(kx, (1000, D_IN), dtype=jnp.float32)

    params = (
        *init_linear(k1, D_IN, H1),
        *init_linear(k2, H1, D_MID),
        *init_linear(k3, D_MID, H3),
        *init_linear(k4, H3, D_OUT),
    )

    out = mlp_b_forward(x, params, block_m=512)
    out = jax.block_until_ready(out)

    ref = reference_forward(x, params)
    assert out.shape == (1000, D_OUT), out.shape
    err = jnp.max(jnp.abs(out - ref))
    # Folding fc2-fc4 is exact algebra; tolerance covers f32 reassociation.
    assert jnp.allclose(out, ref, atol=5e-3, rtol=5e-3), f"max abs err {err}"

    print("KERNEL_OK")
</pallas_src>

<mosaic_0001>
module attributes {stable_mosaic.version = 11 : i64} {
  func.func @mlp_b_kernel(%arg0: i32, %arg1: memref<2x512xf32, #tpu.memory_space<vmem>>, %arg2: memref<256x2xf32, #tpu.memory_space<vmem>>, %arg3: memref<256x1xf32, #tpu.memory_space<vmem>>, %arg4: memref<1x256xf32, #tpu.memory_space<vmem>>, %arg5: memref<1x1xf32, #tpu.memory_space<smem>>, %arg6: memref<1x512xf32, #tpu.memory_space<vmem>>) attributes {dimension_semantics = [#tpu.dimension_semantics<parallel>], iteration_bounds = array<i64: 2>, scalar_prefetch = 0 : i64, scratch_operands = 0 : i64, tpu.core_type = #tpu.core_type<tc>, window_params = [{transform_indices = @transform_0, window_bounds = array<i64: 2, 512>}, {pipeline_mode = #tpu.pipeline_mode<synchronous>, transform_indices = @transform_1, window_bounds = array<i64: 256, 2>}, {pipeline_mode = #tpu.pipeline_mode<synchronous>, transform_indices = @transform_2, window_bounds = array<i64: 256, 1>}, {pipeline_mode = #tpu.pipeline_mode<synchronous>, transform_indices = @transform_3, window_bounds = array<i64: 1, 256>}, {transform_indices = @transform_4, window_bounds = array<i64: 1, 1>}, {transform_indices = @transform_5, window_bounds = array<i64: 1, 512>}]} {
    %c0 = arith.constant 0 : index
    %c0_0 = arith.constant 0 : index
    %0 = vector.load %arg1[%c0, %c0_0] : memref<2x512xf32, #tpu.memory_space<vmem>>, vector<2x512xf32>
    %c0_1 = arith.constant 0 : index
    %c0_2 = arith.constant 0 : index
    %1 = vector.load %arg2[%c0_1, %c0_2] : memref<256x2xf32, #tpu.memory_space<vmem>>, vector<256x1xf32>
    %2 = vector.extract_strided_slice %0 {offsets = [0, 0], sizes = [1, 512], strides = [1, 1]} : vector<2x512xf32> to vector<1x512xf32>
    %3 = vector.broadcast %1 : vector<256x1xf32> to vector<256x512xf32>
    %4 = vector.broadcast %2 : vector<1x512xf32> to vector<256x512xf32>
    %5 = arith.mulf %3, %4 : vector<256x512xf32>
    %c0_3 = arith.constant 0 : index
    %c1 = arith.constant 1 : index
    %6 = vector.load %arg2[%c0_3, %c1] : memref<256x2xf32, #tpu.memory_space<vmem>>, vector<256x1xf32>
    %7 = vector.extract_strided_slice %0 {offsets = [1, 0], sizes = [1, 512], strides = [1, 1]} : vector<2x512xf32> to vector<1x512xf32>
    %8 = vector.broadcast %6 : vector<256x1xf32> to vector<256x512xf32>
    %9 = vector.broadcast %7 : vector<1x512xf32> to vector<256x512xf32>
    %10 = arith.mulf %8, %9 : vector<256x512xf32>
    %11 = arith.addf %5, %10 : vector<256x512xf32>
    %c0_4 = arith.constant 0 : index
    %c0_5 = arith.constant 0 : index
    %12 = vector.load %arg3[%c0_4, %c0_5] : memref<256x1xf32, #tpu.memory_space<vmem>>, vector<256x1xf32>
    %13 = vector.broadcast %12 : vector<256x1xf32> to vector<256x512xf32>
    %14 = arith.addf %11, %13 : vector<256x512xf32>
    %cst = arith.constant 0.000000e+00 : f32
    %15 = vector.broadcast %cst : f32 to vector<256x512xf32>
    %16 = arith.maximumf %14, %15 : vector<256x512xf32>
    %c0_6 = arith.constant 0 : index
    %c0_7 = arith.constant 0 : index
    %17 = vector.load %arg4[%c0_6, %c0_7] : memref<1x256xf32, #tpu.memory_space<vmem>>, vector<1x256xf32>
    %cst_8 = arith.constant dense<0.000000e+00> : vector<1x512xf32>
    %18 = tpu.matmul %17, %16, %cst_8 {dimension_numbers = #tpu.dot_dimension_numbers<[1], [0], [0], [1], [0, 0, 1, 1], [], []>} : vector<1x256xf32>, vector<256x512xf32>, vector<1x512xf32> -> vector<1x512xf32>
    %c0_9 = arith.constant 0 : index
    %c0_10 = arith.constant 0 : index
    %19 = memref.load %arg5[%c0_9, %c0_10] : memref<1x1xf32, #tpu.memory_space<smem>>
    %20 = vector.broadcast %19 : f32 to vector<1x512xf32>
    %21 = arith.addf %18, %20 : vector<1x512xf32>
    %c0_11 = arith.constant 0 : index
    %c0_12 = arith.constant 0 : index
    %22 = vector.load %arg6[%c0_11, %c0_12] : memref<1x512xf32, #tpu.memory_space<vmem>>, vector<1x512xf32>
    tpu.vector_store %arg6[%c0_11, %c0_12], %21 {strides = array<i32>} : memref<1x512xf32, #tpu.memory_space<vmem>>, vector<1x512xf32>,
    return
  }
  func.func @transform_0(%arg0: i32) -> (i32, i32) {
    %c0_i32 = arith.constant 0 : i32
    %c0_i32_0 = arith.constant 0 : i32
    return %c0_i32, %arg0 : i32, i32
  }
  func.func @transform_1(%arg0: i32) -> (i32, i32) {
    %c0_i32 = arith.constant 0 : i32
    %c0_i32_0 = arith.constant 0 : i32
    %c0_i32_1 = arith.constant 0 : i32
    return %c0_i32, %c0_i32_0 : i32, i32
  }
  func.func @transform_2(%arg0: i32) -> (i32, i32) {
    %c0_i32 = arith.constant 0 : i32
    %c0_i32_0 = arith.constant 0 : i32
    %c0_i32_1 = arith.constant 0 : i32
    return %c0_i32, %c0_i32_0 : i32, i32
  }
  func.func @transform_3(%arg0: i32) -> (i32, i32) {
    %c0_i32 = arith.constant 0 : i32
    %c0_i32_0 = arith.constant 0 : i32
    %c0_i32_1 = arith.constant 0 : i32
    return %c0_i32, %c0_i32_0 : i32, i32
  }
  func.func @transform_4(%arg0: i32) -> (i32, i32) {
    %c0_i32 = arith.constant 0 : i32
    %c0_i32_0 = arith.constant 0 : i32
    %c0_i32_1 = arith.constant 0 : i32
    return %c0_i32, %c0_i32_0 : i32, i32
  }
  func.func @transform_5(%arg0: i32) -> (i32, i32) {
    %c0_i32 = arith.constant 0 : i32
    %c0_i32_0 = arith.constant 0 : i32
    return %c0_i32, %arg0 : i32, i32
  }
}

</mosaic_0001>

<llo_original>
// kernel: mlp_b_forward.1
$region0: #{mlp_b_forward.1}
  #allocation0 [shape = 'u32[]', space=smem, size = 0x4, offset = 0x4, fixed_abs, tag = 'smem constant byte address 0x4 - core index']
  #allocation1 [shape = 'u32[72,128]{1,0:T(1,128)}', space=vmem, size = 0x9000, scoped, tag = 'internal scratch']
  #allocation2 [shape = 'f32[1,1]{1,0:T(1,128)S(6)}', space=smem, size = 0x200, scoped, tag = 'scoped memory for mlp_b_forward.1']
  %s0 = inlined_call_operand.vmem [shape: f32[2,1024], index: 0, kind: input, shape index: {}]
  %s1 = inlined_call_operand.vmem [shape: f32[256,2], index: 1, kind: input, shape index: {}]
  %s2 = inlined_call_operand.vmem [shape: f32[256,1], index: 2, kind: input, shape index: {}]
  %s3 = inlined_call_operand.vmem [shape: f32[1,256], index: 3, kind: input, shape index: {}]
  %s4 = inlined_call_operand.<no memory space> [shape: f32[1,1], index: 4, kind: input, shape index: {}]
  %s5 = inlined_call_operand.vmem [shape: f32[1,1024], index: 5, kind: output, shape index: {}]
  %s6 = sld [smem:[#allocation0]]
  $region53: #{mlp_b_forward.1} parent=0
    _
  %s8 = ssub.s32 1, %s6
  %s9 = scalar_select 0, %s8, %s6
  %10 = sst [smem:[#allocation2]] %s4
  loop: start=0, step=1, limit=4
  $region2: #{mlp_b_forward.1} parent=0 // loop_pre_header
    _
  $region3: #{mlp_b_forward.1} parent=0 // loop_header
    %s12 = sphi 0, %s16
    %p13 = scmp.ge.s32.totalorder %s12, 4
    %s22 = sphi 0, %s24
    %s25 = sphi 0, %s22
    %s26 = sphi 0, %s25
    %s42 = sphi 0, %s26
    %s46 = sphi 0, %s46
    %s48 = sphi 0, %s46
    %s49 = sphi 0, %s48
    %s63 = sphi 0, %s49
    %s67 = sphi 0, %s67
    %s69 = sphi 0, %s67
    %s70 = sphi 0, %s69
    %s84 = sphi 0, %s70
    %s88 = sphi 0, %s88
    %s90 = sphi 0, %s88
    %s91 = sphi 0, %s90
    %s105 = sphi 0, %s91
    %s109 = sphi 0, %s109
    %s111 = sphi 0, %s109
    %s112 = sphi 0, %s111
    %s126 = sphi 0, %s112
    %s132 = sphi 0, %s134
    %s135 = sphi 0, %s132
    %s136 = sphi 0, %s135
    %s152 = sphi 0, %s136
  $region4: #{mlp_b_forward.1} parent=0 // loop_header_branch
    %15 = sbr.rel (%p13) target = $region8
  $region5: #{mlp_b_forward.1} parent=0 // loop_body
    %s17 = ssub.s32 %s12, 1
    %s18 = ssub.s32 %s12, 2
    %s19 = sadd.s32 %s12, 1
    %s20 = ssub.s32 %s12, %s19
    %p21 = scmp.eq.s32.totalorder %s20, 0
    %s23 = sadd.s32 %s22, 1
    %s24 = scalar_select %p21, %s22, %s23
    %p27 = pneg %p21
    %p28 = scmp.eq.s32.totalorder %s12, 1
    %p29 = por %p27, %p28
    %p30 = scmp.ne.s32.totalorder %s22, %s25
    %p31 = scmp.eq.s32.totalorder %s12, 0
    %p32 = por %p30, %p31
    %p33 = scmp.ne.s32.totalorder %s22, %s25
    %p34 = scmp.eq.s32.totalorder %s17, 1
    %p35 = por %p33, %p34
    %p36 = scmp.ne.s32.totalorder %s25, %s26
    %p37 = scmp.eq.s32.totalorder %s17, 0
    %p38 = por %p36, %p37
    %p39 = scmp.ne.s32.totalorder %s25, %s26
    %p40 = scmp.eq.s32.totalorder %s18, 1
    %p41 = por %p39, %p40
    %p43 = scmp.ne.s32.totalorder %s26, %s42
    %p44 = scmp.eq.s32.totalorder %s18, 0
    %p45 = por %p43, %p44
    %s47 = sadd.s32 %s46, 1
    %p50 = scmp.eq.s32.totalorder %s12, 1
    %p51 = scmp.ne.s32.totalorder %s46, %s48
    %p52 = scmp.eq.s32.totalorder %s12, 0
    %p53 = por %p51, %p52
    %p54 = scmp.ne.s32.totalorder %s46, %s48
    %p55 = scmp.eq.s32.totalorder %s17, 1
    %p56 = por %p54, %p55
    %p57 = scmp.ne.s32.totalorder %s48, %s49
    %p58 = scmp.eq.s32.totalorder %s17, 0
    %p59 = por %p57, %p58
    %p60 = scmp.ne.s32.totalorder %s48, %s49
    %p61 = scmp.eq.s32.totalorder %s18, 1
    %p62 = por %p60, %p61
    %p64 = scmp.ne.s32.totalorder %s49, %s63
    %p65 = scmp.eq.s32.totalorder %s18, 0
    %p66 = por %p64, %p65
    %s68 = sadd.s32 %s67, 1
    %p71 = scmp.eq.s32.totalorder %s12, 1
    %p72 = scmp.ne.s32.totalorder %s67, %s69
    %p73 = scmp.eq.s32.totalorder %s12, 0
    %p74 = por %p72, %p73
    %p75 = scmp.ne.s32.totalorder %s67, %s69
    %p76 = scmp.eq.s32.totalorder %s17, 1
    %p77 = por %p75, %p76
    %p78 = scmp.ne.s32.totalorder %s69, %s70
    %p79 = scmp.eq.s32.totalorder %s17, 0
    %p80 = por %p78, %p79
    %p81 = scmp.ne.s32.totalorder %s69, %s70
    %p82 = scmp.eq.s32.totalorder %s18, 1
    %p83 = por %p81, %p82
    %p85 = scmp.ne.s32.totalorder %s70, %s84
    %p86 = scmp.eq.s32.totalorder %s18, 0
    %p87 = por %p85, %p86
    %s89 = sadd.s32 %s88, 1
    %p92 = scmp.eq.s32.totalorder %s12, 1
    %p93 = scmp.ne.s32.totalorder %s88, %s90
    %p94 = scmp.eq.s32.totalorder %s12, 0
    %p95 = por %p93, %p94
    %p96 = scmp.ne.s32.totalorder %s88, %s90
    %p97 = scmp.eq.s32.totalorder %s17, 1
    %p98 = por %p96, %p97
    %p99 = scmp.ne.s32.totalorder %s90, %s91
    %p100 = scmp.eq.s32.totalorder %s17, 0
    %p101 = por %p99, %p100
    %p102 = scmp.ne.s32.totalorder %s90, %s91
    %p103 = scmp.eq.s32.totalorder %s18, 1
    %p104 = por %p102, %p103
    %p106 = scmp.ne.s32.totalorder %s91, %s105
    %p107 = scmp.eq.s32.totalorder %s18, 0
    %p108 = por %p106, %p107
    %s110 = sadd.s32 %s109, 1
    %p113 = scmp.eq.s32.totalorder %s12, 1
    %p114 = scmp.ne.s32.totalorder %s109, %s111
    %p115 = scmp.eq.s32.totalorder %s12, 0
    %p116 = por %p114, %p115
    %p117 = scmp.ne.s32.totalorder %s109, %s111
    %p118 = scmp.eq.s32.totalorder %s17, 1
    %p119 = por %p117, %p118
    %p120 = scmp.ne.s32.totalorder %s111, %s112
    %p121 = scmp.eq.s32.totalorder %s17, 0
    %p122 = por %p120, %p121
    %p123 = scmp.ne.s32.totalorder %s111, %s112
    %p124 = scmp.eq.s32.totalorder %s18, 1
    %p125 = por %p123, %p124
    %p127 = scmp.ne.s32.totalorder %s112, %s126
    %p128 = scmp.eq.s32.totalorder %s18, 0
    %p129 = por %p127, %p128
    %s130 = ssub.s32 %s12, %s19
    %p131 = scmp.eq.s32.totalorder %s130, 0
    %s133 = sadd.s32 %s132, 1
    %s134 = scalar_select %p131, %s132, %s133
    %p137 = pneg %p131
    %p138 = scmp.eq.s32.totalorder %s12, 1
    %p139 = por %p137, %p138
    %p140 = scmp.ne.s32.totalorder %s132, %s135
    %p141 = scmp.eq.s32.totalorder %s12, 0
    %p142 = por %p140, %p141
    %p143 = scmp.ne.s32.totalorder %s132, %s135
    %p144 = scmp.eq.s32.totalorder %s17, 1
    %p145 = por %p143, %p144
    %p146 = scmp.ne.s32.totalorder %s135, %s136
    %p147 = scmp.eq.s32.totalorder %s17, 0
    %p148 = por %p146, %p147
    %p149 = scmp.ne.s32.totalorder %s135, %s136
    %p150 = scmp.eq.s32.totalorder %s18, 1
    %p151 = por %p149, %p150
    %p153 = scmp.ne.s32.totalorder %s136, %s152
    %p154 = scmp.eq.s32.totalorder %s18, 0
    %p155 = por %p153, %p154
    %p156 = scmp.le.s32.totalorder 1, %s12
    %p157 = scmp.lt.s32.totalorder %s12, 3
    %p158 = pnand %p156, %p157
    %p159 = pneg %p158
    // Predicated region
    $region9: #{mlp_b_forward.1} parent=5 // pred_check
      _
    $region10: #{mlp_b_forward.1} parent=5 // pred_check_branch
      %161 = sbr.rel (%p158) target = $region12
    $region11: #{mlp_b_forward.1} parent=5 // pred_region
      %s162 = ssub.s32 %s12, 1
      // Predicated region
      $region13: #{mlp_b_forward.1} parent=11 // pred_check
        %p163 = pneg %p59
      $region14: #{mlp_b_forward.1} parent=11 // pred_check_branch
        %165 = sbr.rel (%p163) target = $region16
      $region15: #{mlp_b_forward.1} parent=11 // pred_region
        _
      $region16: #{mlp_b_forward.1} parent=11 // pred_fallthru
        _
      // Predicated region
      $region17: #{mlp_b_forward.1} parent=11 // pred_check
        %p166 = pneg %p80
      $region18: #{mlp_b_forward.1} parent=11 // pred_check_branch
        %168 = sbr.rel (%p166) target = $region20
      $region19: #{mlp_b_forward.1} parent=11 // pred_region
        _
      $region20: #{mlp_b_forward.1} parent=11 // pred_fallthru
        _
      // Predicated region
      $region21: #{mlp_b_forward.1} parent=11 // pred_check
        %p169 = pneg %p101
      $region22: #{mlp_b_forward.1} parent=11 // pred_check_branch
        %171 = sbr.rel (%p169) target = $region24
      $region23: #{mlp_b_forward.1} parent=11 // pred_region
        _
      $region24: #{mlp_b_forward.1} parent=11 // pred_fallthru
        _
      // Predicated region
      $region25: #{mlp_b_forward.1} parent=11 // pred_check
        %p172 = pneg %p122
      $region26: #{mlp_b_forward.1} parent=11 // pred_check_branch
        %174 = sbr.rel (%p172) target = $region28
      $region27: #{mlp_b_forward.1} parent=11 // pred_region
        _
      $region28: #{mlp_b_forward.1} parent=11 // pred_fallthru
        _
    $region12: #{mlp_b_forward.1} parent=5 // pred_fallthru
      _
    %p175 = scmp.lt.s32.totalorder %s12, 2
    // Predicated region
    $region29: #{mlp_b_forward.1} parent=5 // pred_check
      %p176 = pneg %p175
    $region30: #{mlp_b_forward.1} parent=5 // pred_check_branch
      %178 = sbr.rel (%p176) target = $region32
    $region31: #{mlp_b_forward.1} parent=5 // pred_region
      // Predicated region
      $region33: #{mlp_b_forward.1} parent=31 // pred_check
        %p179 = pneg %p32
      $region34: #{mlp_b_forward.1} parent=31 // pred_check_branch
        %181 = sbr.rel (%p179) target = $region36
      $region35: #{mlp_b_forward.1} parent=31 // pred_region
        %s182 = smul.u32 4, %s12
        %p183 = scmp.lt.s32.totalorder %s182, 7
        %s184 = scalar_select %p183, %s182, 7
        %s185 = smul.addr %s184, 2
        %s186 = scalar_lea.vmem %s0, %s185
        %s187 = smul.u32 4, %s12
      $region36: #{mlp_b_forward.1} parent=31 // pred_fallthru
        _
    $region32: #{mlp_b_forward.1} parent=5 // pred_fallthru
      _
    %p188 = scmp.le.s32.totalorder 1, %s12
    %p189 = scmp.lt.s32.totalorder %s12, 3
    %p190 = pnand %p188, %p189
    %p191 = pneg %p190
    // Predicated region
    $region37: #{mlp_b_forward.1} parent=5 // pred_check
      _
    $region38: #{mlp_b_forward.1} parent=5 // pred_check_branch
      %193 = sbr.rel (%p190) target = $region40
    $region39: #{mlp_b_forward.1} parent=5 // pred_region
      %s194 = ssub.s32 %s12, 1
      %s195 = smul.u32 4, %s17
      %p196 = scmp.lt.s32.totalorder %s195, 7
      %s197 = scalar_select %p196, %s195, 7
      %s198 = smul.addr %s197, 2
      %s199 = scalar_lea.vmem %s0, %s198
      %p200 = pneg %p38
      %p201 = pneg %p35
      %p202 = pneg %p59
      %p203 = pneg %p56
      %p204 = pneg %p80
      %p205 = pneg %p77
      %p206 = pneg %p101
      %p207 = pneg %p98
      %p208 = pneg %p122
      %p209 = pneg %p119
      %p210 = pneg %p148
      %p211 = pneg %p145
      %s212 = smul.u32 4, %s17
      %p213 = scmp.lt.s32.totalorder %s212, 7
      %s214 = scalar_select %p213, %s212, 7
      %s215 = scalar_lea.vmem %s5, %s214
      %s216 = smul.u32 4, %s17
      %p217 = scmp.lt.s32.totalorder %s216, 7
      %s218 = scalar_select %p217, %s216, 7
      %s219 = smul.addr %s218, 2
      %s220 = scalar_lea.vmem %s0, %s219
      %s221 = smul.u32 4, %s17
      %s222 = smul.u32 4, %s17
      %p223 = scmp.lt.s32.totalorder %s222, 7
      %s224 = scalar_select %p223, %s222, 7
      %s225 = scalar_lea.vmem %s5, %s224
      %s226 = smul.u32 4, %s17
      %v227 = vld [vmem:[%s220] sm:$0xff]
      %v228 = vld [vmem:[%s1] sm:$0xff]
      %v229 = vld [vmem:[%s1 + $0x8] sm:$0xff]
      %v230 = vld [vmem:[%s1 + $0x10] sm:$0xff]
      %v231 = vld [vmem:[%s1 + $0x18] sm:$0xff]
      %v232 = vld [vmem:[%s1 + $0x20] sm:$0xff]
      %v233 = vld [vmem:[%s1 + $0x28] sm:$0xff]
      %v234 = vld [vmem:[%s1 + $0x30] sm:$0xff]
      %v235 = vld [vmem:[%s1 + $0x38] sm:$0xff]
      %v236 = vld [vmem:[%s1 + $0x40] sm:$0xff]
      %v237 = vld [vmem:[%s1 + $0x48] sm:$0xff]
      %v238 = vld [vmem:[%s1 + $0x50] sm:$0xff]
      %v239 = vld [vmem:[%s1 + $0x58] sm:$0xff]
      %v240 = vld [vmem:[%s1 + $0x60] sm:$0xff]
      %v241 = vld [vmem:[%s1 + $0x68] sm:$0xff]
      %v242 = vld [vmem:[%s1 + $0x70] sm:$0xff]
      %v243 = vld [vmem:[%s1 + $0x78] sm:$0xff]
      %v244 = vld [vmem:[%s1 + $0x80] sm:$0xff]
      %v245 = vld [vmem:[%s1 + $0x88] sm:$0xff]
      %v246 = vld [vmem:[%s1 + $0x90] sm:$0xff]
      %v247 = vld [vmem:[%s1 + $0x98] sm:$0xff]
      %v248 = vld [vmem:[%s1 + $0xa0] sm:$0xff]
      %v249 = vld [vmem:[%s1 + $0xa8] sm:$0xff]
      %v250 = vld [vmem:[%s1 + $0xb0] sm:$0xff]
      %v251 = vld [vmem:[%s1 + $0xb8] sm:$0xff]
      %v252 = vld [vmem:[%s1 + $0xc0] sm:$0xff]
      %v253 = vld [vmem:[%s1 + $0xc8] sm:$0xff]
      %v254 = vld [vmem:[%s1 + $0xd0] sm:$0xff]
      %v255 = vld [vmem:[%s1 + $0xd8] sm:$0xff]
      %v256 = vld [vmem:[%s1 + $0xe0] sm:$0xff]
      %v257 = vld [vmem:[%s1 + $0xe8] sm:$0xff]
      %v258 = vld [vmem:[%s1 + $0xf0] sm:$0xff]
      %v259 = vld [vmem:[%s1 + $0xf8] sm:$0xff]
      %261 = vset.pattern.permute.xlu0 0
      %262 = vperm.xlu0 %261, %v228
      %v263 = vpop.permute.xlu0 %262
      %266 = vset.pattern.permute.xlu0 0
      %267 = vperm.xlu0 %266, %v229
      %v268 = vpop.permute.xlu0 %267
      %271 = vset.pattern.permute.xlu0 0
      %272 = vperm.xlu0 %271, %v230
      %v273 = vpop.permute.xlu0 %272
      %276 = vset.pattern.permute.xlu0 0
      %277 = vperm.xlu0 %276, %v231
      %v278 = vpop.permute.xlu0 %277
      %281 = vset.pattern.permute.xlu0 0
      %282 = vperm.xlu0 %281, %v232
      %v283 = vpop.permute.xlu0 %282
      %286 = vset.pattern.permute.xlu0 0
      %287 = vperm.xlu0 %286, %v233
      %v288 = vpop.permute.xlu0 %287
      %291 = vset.pattern.permute.xlu0 0
      %292 = vperm.xlu0 %291, %v234
      %v293 = vpop.permute.xlu0 %292
      %296 = vset.pattern.permute.xlu0 0
      %297 = vperm.xlu0 %296, %v235
      %v298 = vpop.permute.xlu0 %297
      %301 = vset.pattern.permute.xlu0 0
      %302 = vperm.xlu0 %301, %v236
      %v303 = vpop.permute.xlu0 %302
      %306 = vset.pattern.permute.xlu0 0
      %307 = vperm.xlu0 %306, %v237
      %v308 = vpop.permute.xlu0 %307
      %311 = vset.pattern.permute.xlu0 0
      %312 = vperm.xlu0 %311, %v238
      %v313 = vpop.permute.xlu0 %312
      %316 = vset.pattern.permute.xlu0 0
      %317 = vperm.xlu0 %316, %v239
      %v318 = vpop.permute.xlu0 %317
      %321 = vset.pattern.permute.xlu0 0
      %322 = vperm.xlu0 %321, %v240
      %v323 = vpop.permute.xlu0 %322
      %326 = vset.pattern.permute.xlu0 0
      %327 = vperm.xlu0 %326, %v241
      %v328 = vpop.permute.xlu0 %327
      %331 = vset.pattern.permute.xlu0 0
      %332 = vperm.xlu0 %331, %v242
      %v333 = vpop.permute.xlu0 %332
      %336 = vset.pattern.permute.xlu0 0
      %337 = vperm.xlu0 %336, %v243
      %v338 = vpop.permute.xlu0 %337
      %341 = vset.pattern.permute.xlu0 0
      %342 = vperm.xlu0 %341, %v244
      %v343 = vpop.permute.xlu0 %342
      %346 = vset.pattern.permute.xlu0 0
      %347 = vperm.xlu0 %346, %v245
      %v348 = vpop.permute.xlu0 %347
      %351 = vset.pattern.permute.xlu0 0
      %352 = vperm.xlu0 %351, %v246
      %v353 = vpop.permute.xlu0 %352
      %356 = vset.pattern.permute.xlu0 0
      %357 = vperm.xlu0 %356, %v247
      %v358 = vpop.permute.xlu0 %357
      %361 = vset.pattern.permute.xlu0 0
      %362 = vperm.xlu0 %361, %v248
      %v363 = vpop.permute.xlu0 %362
      %366 = vset.pattern.permute.xlu0 0
      %367 = vperm.xlu0 %366, %v249
      %v368 = vpop.permute.xlu0 %367
      %371 = vset.pattern.permute.xlu0 0
      %372 = vperm.xlu0 %371, %v250
      %v373 = vpop.permute.xlu0 %372
      %376 = vset.pattern.permute.xlu0 0
      %377 = vperm.xlu0 %376, %v251
      %v378 = vpop.permute.xlu0 %377
      %381 = vset.pattern.permute.xlu0 0
      %382 = vperm.xlu0 %381, %v252
      %v383 = vpop.permute.xlu0 %382
      %386 = vset.pattern.permute.xlu0 0
      %387 = vperm.xlu0 %386, %v253
      %v388 = vpop.permute.xlu0 %387
      %391 = vset.pattern.permute.xlu0 0
      %392 = vperm.xlu0 %391, %v254
      %v393 = vpop.permute.xlu0 %392
      %396 = vset.pattern.permute.xlu0 0
      %397 = vperm.xlu0 %396, %v255
      %v398 = vpop.permute.xlu0 %397
      %401 = vset.pattern.permute.xlu0 0
      %402 = vperm.xlu0 %401, %v256
      %v403 = vpop.permute.xlu0 %402
      %406 = vset.pattern.permute.xlu0 0
      %407 = vperm.xlu0 %406, %v257
      %v408 = vpop.permute.xlu0 %407
      %411 = vset.pattern.permute.xlu0 0
      %412 = vperm.xlu0 %411, %v258
      %v413 = vpop.permute.xlu0 %412
      %416 = vset.pattern.permute.xlu0 0
      %417 = vperm.xlu0 %416, %v259
      %v418 = vpop.permute.xlu0 %417
      %v421 = vperm.slane %v227, 0
      %v422 = vperm.slane %v227, 2
      %v423 = vperm.slane %v227, 4
      %v424 = vperm.slane %v227, 6
      %v429 = vperm.slane %v421, 0
      %v430 = vperm.slane %v422, 0
      %v431 = vperm.slane %v423, 0
      %v432 = vperm.slane %v424, 0
      %v433 = vmul.f32 %v263, %v429
      %v434 = vmul.f32 %v263, %v430
      %v435 = vmul.f32 %v263, %v431
      %v436 = vmul.f32 %v263, %v432
      %v437 = vmul.f32 %v268, %v429
      %v438 = vmul.f32 %v268, %v430
      %v439 = vmul.f32 %v268, %v431
      %v440 = vmul.f32 %v268, %v432
      %v441 = vmul.f32 %v273, %v429
      %v442 = vmul.f32 %v273, %v430
      %v443 = vmul.f32 %v273, %v431
      %v444 = vmul.f32 %v273, %v432
      %v445 = vmul.f32 %v278, %v429
      %v446 = vmul.f32 %v278, %v430
      %v447 = vmul.f32 %v278, %v431
      %v448 = vmul.f32 %v278, %v432
      %v449 = vmul.f32 %v283, %v429
      %v450 = vmul.f32 %v283, %v430
      %v451 = vmul.f32 %v283, %v431
      %v452 = vmul.f32 %v283, %v432
      %v453 = vmul.f32 %v288, %v429
      %v454 = vmul.f32 %v288, %v430
      %v455 = vmul.f32 %v288, %v431
      %v456 = vmul.f32 %v288, %v432
      %v457 = vmul.f32 %v293, %v429
      %v458 = vmul.f32 %v293, %v430
      %v459 = vmul.f32 %v293, %v431
      %v460 = vmul.f32 %v293, %v432
      %v461 = vmul.f32 %v298, %v429
      %v462 = vmul.f32 %v298, %v430
      %v463 = vmul.f32 %v298, %v431
      %v464 = vmul.f32 %v298, %v432
      %v465 = vmul.f32 %v303, %v429
      %v466 = vmul.f32 %v303, %v430
      %v467 = vmul.f32 %v303, %v431
      %v468 = vmul.f32 %v303, %v432
      %v469 = vmul.f32 %v308, %v429
      %v470 = vmul.f32 %v308, %v430
      %v471 = vmul.f32 %v308, %v431
      %v472 = vmul.f32 %v308, %v432
      %v473 = vmul.f32 %v313, %v429
      %v474 = vmul.f32 %v313, %v430
      %v475 = vmul.f32 %v313, %v431
      %v476 = vmul.f32 %v313, %v432
      %v477 = vmul.f32 %v318, %v429
      %v478 = vmul.f32 %v318, %v430
      %v479 = vmul.f32 %v318, %v431
      %v480 = vmul.f32 %v318, %v432
      %v481 = vmul.f32 %v323, %v429
      %v482 = vmul.f32 %v323, %v430
      %v483 = vmul.f32 %v323, %v431
      %v484 = vmul.f32 %v323, %v432
      %v485 = vmul.f32 %v328, %v429
      %v486 = vmul.f32 %v328, %v430
      %v487 = vmul.f32 %v328, %v431
      %v488 = vmul.f32 %v328, %v432
      %v489 = vmul.f32 %v333, %v429
      %v490 = vmul.f32 %v333, %v430
      %v491 = vmul.f32 %v333, %v431
      %v492 = vmul.f32 %v333, %v432
      %v493 = vmul.f32 %v338, %v429
      %v494 = vmul.f32 %v338, %v430
      %v495 = vmul.f32 %v338, %v431
      %v496 = vmul.f32 %v338, %v432
      %v497 = vmul.f32 %v343, %v429
      %v498 = vmul.f32 %v343, %v430
      %v499 = vmul.f32 %v343, %v431
      %v500 = vmul.f32 %v343, %v432
      %v501 = vmul.f32 %v348, %v429
      %v502 = vmul.f32 %v348, %v430
      %v503 = vmul.f32 %v348, %v431
      %v504 = vmul.f32 %v348, %v432
      %v505 = vmul.f32 %v353, %v429
      %v506 = vmul.f32 %v353, %v430
      %v507 = vmul.f32 %v353, %v431
      %v508 = vmul.f32 %v353, %v432
      %v509 = vmul.f32 %v358, %v429
      %v510 = vmul.f32 %v358, %v430
      %v511 = vmul.f32 %v358, %v431
      %v512 = vmul.f32 %v358, %v432
      %v513 = vmul.f32 %v363, %v429
      %v514 = vmul.f32 %v363, %v430
      %v515 = vmul.f32 %v363, %v431
      %v516 = vmul.f32 %v363, %v432
      %v517 = vmul.f32 %v368, %v429
      %v518 = vmul.f32 %v368, %v430
      %v519 = vmul.f32 %v368, %v431
      %v520 = vmul.f32 %v368, %v432
      %v521 = vmul.f32 %v373, %v429
      %v522 = vmul.f32 %v373, %v430
      %v523 = vmul.f32 %v373, %v431
      %v524 = vmul.f32 %v373, %v432
      %v525 = vmul.f32 %v378, %v429
      %v526 = vmul.f32 %v378, %v430
      %v527 = vmul.f32 %v378, %v431
      %v528 = vmul.f32 %v378, %v432
      %v529 = vmul.f32 %v383, %v429
      %v530 = vmul.f32 %v383, %v430
      %v531 = vmul.f32 %v383, %v431
      %v532 = vmul.f32 %v383, %v432
      %v533 = vmul.f32 %v388, %v429
      %v534 = vmul.f32 %v388, %v430
      %v535 = vmul.f32 %v388, %v431
      %v536 = vmul.f32 %v388, %v432
      %v537 = vmul.f32 %v393, %v429
      %v538 = vmul.f32 %v393, %v430
      %v539 = vmul.f32 %v393, %v431
      %v540 = vmul.f32 %v393, %v432
      %v541 = vmul.f32 %v398, %v429
      %v542 = vmul.f32 %v398, %v430
      %v543 = vmul.f32 %v398, %v431
      %v544 = vmul.f32 %v398, %v432
      %v545 = vmul.f32 %v403, %v429
      %v546 = vmul.f32 %v403, %v430
      %v547 = vmul.f32 %v403, %v431
      %v548 = vmul.f32 %v403, %v432
      %v549 = vmul.f32 %v408, %v429
      %v550 = vmul.f32 %v408, %v430
      %v551 = vmul.f32 %v408, %v431
      %v552 = vmul.f32 %v408, %v432
      %v553 = vmul.f32 %v413, %v429
      %v554 = vmul.f32 %v413, %v430
      %v555 = vmul.f32 %v413, %v431
      %v556 = vmul.f32 %v413, %v432
      %v557 = vmul.f32 %v418, %v429
      %v558 = vmul.f32 %v418, %v430
      %v559 = vmul.f32 %v418, %v431
      %v560 = vmul.f32 %v418, %v432
      %561 = vset.pattern.permute.xlu0 1
      %562 = vperm.xlu0 %561, %v228
      %v563 = vpop.permute.xlu0 %562
      %565 = vset.pattern.permute.xlu0 1
      %566 = vperm.xlu0 %565, %v229
      %v567 = vpop.permute.xlu0 %566
      %569 = vset.pattern.permute.xlu0 1
      %570 = vperm.xlu0 %569, %v230
      %v571 = vpop.permute.xlu0 %570
      %573 = vset.pattern.permute.xlu0 1
      %574 = vperm.xlu0 %573, %v231
      %v575 = vpop.permute.xlu0 %574
      %577 = vset.pattern.permute.xlu0 1
      %578 = vperm.xlu0 %577, %v232
      %v579 = vpop.permute.xlu0 %578
      %581 = vset.pattern.permute.xlu0 1
      %582 = vperm.xlu0 %581, %v233
      %v583 = vpop.permute.xlu0 %582
      %585 = vset.pattern.permute.xlu0 1
      %586 = vperm.xlu0 %585, %v234
      %v587 = vpop.permute.xlu0 %586
      %589 = vset.pattern.permute.xlu0 1
      %590 = vperm.xlu0 %589, %v235
      %v591 = vpop.permute.xlu0 %590
      %593 = vset.pattern.permute.xlu0 1
      %594 = vperm.xlu0 %593, %v236
      %v595 = vpop.permute.xlu0 %594
      %597 = vset.pattern.permute.xlu0 1
      %598 = vperm.xlu0 %597, %v237
      %v599 = vpop.permute.xlu0 %598
      %601 = vset.pattern.permute.xlu0 1
      %602 = vperm.xlu0 %601, %v238
      %v603 = vpop.permute.xlu0 %602
      %605 = vset.pattern.permute.xlu0 1
      %606 = vperm.xlu0 %605, %v239
      %v607 = vpop.permute.xlu0 %606
      %609 = vset.pattern.permute.xlu0 1
      %610 = vperm.xlu0 %609, %v240
      %v611 = vpop.permute.xlu0 %610
      %613 = vset.pattern.permute.xlu0 1
      %614 = vperm.xlu0 %613, %v241
      %v615 = vpop.permute.xlu0 %614
      %617 = vset.pattern.permute.xlu0 1
      %618 = vperm.xlu0 %617, %v242
      %v619 = vpop.permute.xlu0 %618
      %621 = vset.pattern.permute.xlu0 1
      %622 = vperm.xlu0 %621, %v243
      %v623 = vpop.permute.xlu0 %622
      %625 = vset.pattern.permute.xlu0 1
      %626 = vperm.xlu0 %625, %v244
      %v627 = vpop.permute.xlu0 %626
      %629 = vset.pattern.permute.xlu0 1
      %630 = vperm.xlu0 %629, %v245
      %v631 = vpop.permute.xlu0 %630
      %633 = vset.pattern.permute.xlu0 1
      %634 = vperm.xlu0 %633, %v246
      %v635 = vpop.permute.xlu0 %634
      %637 = vset.pattern.permute.xlu0 1
      %638 = vperm.xlu0 %637, %v247
      %v639 = vpop.permute.xlu0 %638
      %641 = vset.pattern.permute.xlu0 1
      %642 = vperm.xlu0 %641, %v248
      %v643 = vpop.permute.xlu0 %642
      %645 = vset.pattern.permute.xlu0 1
      %646 = vperm.xlu0 %645, %v249
      %v647 = vpop.permute.xlu0 %646
      %649 = vset.pattern.permute.xlu0 1
      %650 = vperm.xlu0 %649, %v250
      %v651 = vpop.permute.xlu0 %650
      %653 = vset.pattern.permute.xlu0 1
      %654 = vperm.xlu0 %653, %v251
      %v655 = vpop.permute.xlu0 %654
      %657 = vset.pattern.permute.xlu0 1
      %658 = vperm.xlu0 %657, %v252
      %v659 = vpop.permute.xlu0 %658
      %661 = vset.pattern.permute.xlu0 1
      %662 = vperm.xlu0 %661, %v253
      %v663 = vpop.permute.xlu0 %662
      %665 = vset.pattern.permute.xlu0 1
      %666 = vperm.xlu0 %665, %v254
      %v667 = vpop.permute.xlu0 %666
      %669 = vset.pattern.permute.xlu0 1
      %670 = vperm.xlu0 %669, %v255
      %v671 = vpop.permute.xlu0 %670
      %673 = vset.pattern.permute.xlu0 1
      %674 = vperm.xlu0 %673, %v256
      %v675 = vpop.permute.xlu0 %674
      %677 = vset.pattern.permute.xlu0 1
      %678 = vperm.xlu0 %677, %v257
      %v679 = vpop.permute.xlu0 %678
      %681 = vset.pattern.permute.xlu0 1
      %682 = vperm.xlu0 %681, %v258
      %v683 = vpop.permute.xlu0 %682
      %685 = vset.pattern.permute.xlu0 1
      %686 = vperm.xlu0 %685, %v259
      %v687 = vpop.permute.xlu0 %686
      %v689 = vperm.slane %v227, 1
      %v690 = vperm.slane %v227, 3
      %v691 = vperm.slane %v227, 5
      %v692 = vperm.slane %v227, 7
      %v697 = vperm.slane %v689, 1
      %v698 = vperm.slane %v690, 1
      %v699 = vperm.slane %v691, 1
      %v700 = vperm.slane %v692, 1
      %v701 = vmul.f32 %v563, %v697
      %v702 = vmul.f32 %v563, %v698
      %v703 = vmul.f32 %v563, %v699
      %v704 = vmul.f32 %v563, %v700
      %v705 = vmul.f32 %v567, %v697
      %v706 = vmul.f32 %v567, %v698
      %v707 = vmul.f32 %v567, %v699
      %v708 = vmul.f32 %v567, %v700
      %v709 = vmul.f32 %v571, %v697
      %v710 = vmul.f32 %v571, %v698
      %v711 = vmul.f32 %v571, %v699
      %v712 = vmul.f32 %v571, %v700
      %v713 = vmul.f32 %v575, %v697
      %v714 = vmul.f32 %v575, %v698
      %v715 = vmul.f32 %v575, %v699
      %v716 = vmul.f32 %v575, %v700
      %v717 = vmul.f32 %v579, %v697
      %v718 = vmul.f32 %v579, %v698
      %v719 = vmul.f32 %v579, %v699
      %v720 = vmul.f32 %v579, %v700
      %v721 = vmul.f32 %v583, %v697
      %v722 = vmul.f32 %v583, %v698
      %v723 = vmul.f32 %v583, %v699
      %v724 = vmul.f32 %v583, %v700
      %v725 = vmul.f32 %v587, %v697
      %v726 = vmul.f32 %v587, %v698
      %v727 = vmul.f32 %v587, %v699
      %v728 = vmul.f32 %v587, %v700
      %v729 = vmul.f32 %v591, %v697
      %v730 = vmul.f32 %v591, %v698
      %v731 = vmul.f32 %v591, %v699
      %v732 = vmul.f32 %v591, %v700
      %v733 = vmul.f32 %v595, %v697
      %v734 = vmul.f32 %v595, %v698
      %v735 = vmul.f32 %v595, %v699
      %v736 = vmul.f32 %v595, %v700
      %v737 = vmul.f32 %v599, %v697
      %v738 = vmul.f32 %v599, %v698
      %v739 = vmul.f32 %v599, %v699
      %v740 = vmul.f32 %v599, %v700
      %v741 = vmul.f32 %v603, %v697
      %v742 = vmul.f32 %v603, %v698
      %v743 = vmul.f32 %v603, %v699
      %v744 = vmul.f32 %v603, %v700
      %v745 = vmul.f32 %v607, %v697
      %v746 = vmul.f32 %v607, %v698
      %v747 = vmul.f32 %v607, %v699
      %v748 = vmul.f32 %v607, %v700
      %v749 = vmul.f32 %v611, %v697
      %v750 = vmul.f32 %v611, %v698
      %v751 = vmul.f32 %v611, %v699
      %v752 = vmul.f32 %v611, %v700
      %v753 = vmul.f32 %v615, %v697
      %v754 = vmul.f32 %v615, %v698
      %v755 = vmul.f32 %v615, %v699
      %v756 = vmul.f32 %v615, %v700
      %v757 = vmul.f32 %v619, %v697
      %v758 = vmul.f32 %v619, %v698
      %v759 = vmul.f32 %v619, %v699
      %v760 = vmul.f32 %v619, %v700
      %v761 = vmul.f32 %v623, %v697
      %v762 = vmul.f32 %v623, %v698
      %v763 = vmul.f32 %v623, %v699
      %v764 = vmul.f32 %v623, %v700
      %v765 = vmul.f32 %v627, %v697
      %v766 = vmul.f32 %v627, %v698
      %v767 = vmul.f32 %v627, %v699
      %v768 = vmul.f32 %v627, %v700
      %v769 = vmul.f32 %v631, %v697
      %v770 = vmul.f32 %v631, %v698
      %v771 = vmul.f32 %v631, %v699
      %v772 = vmul.f32 %v631, %v700
      %v773 = vmul.f32 %v635, %v697
      %v774 = vmul.f32 %v635, %v698
      %v775 = vmul.f32 %v635, %v699
      %v776 = vmul.f32 %v635, %v700
      %v777 = vmul.f32 %v639, %v697
      %v778 = vmul.f32 %v639, %v698
      %v779 = vmul.f32 %v639, %v699
      %v780 = vmul.f32 %v639, %v700
      %v781 = vmul.f32 %v643, %v697
      %v782 = vmul.f32 %v643, %v698
      %v783 = vmul.f32 %v643, %v699
      %v784 = vmul.f32 %v643, %v700
      %v785 = vmul.f32 %v647, %v697
      %v786 = vmul.f32 %v647, %v698
      %v787 = vmul.f32 %v647, %v699
      %v788 = vmul.f32 %v647, %v700
      %v789 = vmul.f32 %v651, %v697
      %v790 = vmul.f32 %v651, %v698
      %v791 = vmul.f32 %v651, %v699
      %v792 = vmul.f32 %v651, %v700
      %v793 = vmul.f32 %v655, %v697
      %v794 = vmul.f32 %v655, %v698
      %v795 = vmul.f32 %v655, %v699
      %v796 = vmul.f32 %v655, %v700
      %v797 = vmul.f32 %v659, %v697
      %v798 = vmul.f32 %v659, %v698
      %v799 = vmul.f32 %v659, %v699
      %v800 = vmul.f32 %v659, %v700
      %v801 = vmul.f32 %v663, %v697
      %v802 = vmul.f32 %v663, %v698
      %v803 = vmul.f32 %v663, %v699
      %v804 = vmul.f32 %v663, %v700
      %v805 = vmul.f32 %v667, %v697
      %v806 = vmul.f32 %v667, %v698
      %v807 = vmul.f32 %v667, %v699
      %v808 = vmul.f32 %v667, %v700
      %v809 = vmul.f32 %v671, %v697
      %v810 = vmul.f32 %v671, %v698
      %v811 = vmul.f32 %v671, %v699
      %v812 = vmul.f32 %v671, %v700
      %v813 = vmul.f32 %v675, %v697
      %v814 = vmul.f32 %v675, %v698
      %v815 = vmul.f32 %v675, %v699
      %v816 = vmul.f32 %v675, %v700
      %v817 = vmul.f32 %v679, %v697
      %v818 = vmul.f32 %v679, %v698
      %v819 = vmul.f32 %v679, %v699
      %v820 = vmul.f32 %v679, %v700
      %v821 = vmul.f32 %v683, %v697
      %v822 = vmul.f32 %v683, %v698
      %v823 = vmul.f32 %v683, %v699
      %v824 = vmul.f32 %v683, %v700
      %v825 = vmul.f32 %v687, %v697
      %v826 = vmul.f32 %v687, %v698
      %v827 = vmul.f32 %v687, %v699
      %v828 = vmul.f32 %v687, %v700
      %v829 = vadd.f32 %v433, %v701
      %v830 = vadd.f32 %v434, %v702
      %v831 = vadd.f32 %v435, %v703
      %v832 = vadd.f32 %v436, %v704
      %v833 = vadd.f32 %v437, %v705
      %v834 = vadd.f32 %v438, %v706
      %v835 = vadd.f32 %v439, %v707
      %v836 = vadd.f32 %v440, %v708
      %v837 = vadd.f32 %v441, %v709
      %v838 = vadd.f32 %v442, %v710
      %v839 = vadd.f32 %v443, %v711
      %v840 = vadd.f32 %v444, %v712
      %v841 = vadd.f32 %v445, %v713
      %v842 = vadd.f32 %v446, %v714
      %v843 = vadd.f32 %v447, %v715
      %v844 = vadd.f32 %v448, %v716
      %v845 = vadd.f32 %v449, %v717
      %v846 = vadd.f32 %v450, %v718
      %v847 = vadd.f32 %v451, %v719
      %v848 = vadd.f32 %v452, %v720
      %v849 = vadd.f32 %v453, %v721
      %v850 = vadd.f32 %v454, %v722
      %v851 = vadd.f32 %v455, %v723
      %v852 = vadd.f32 %v456, %v724
      %v853 = vadd.f32 %v457, %v725
      %v854 = vadd.f32 %v458, %v726
      %v855 = vadd.f32 %v459, %v727
      %v856 = vadd.f32 %v460, %v728
      %v857 = vadd.f32 %v461, %v729
      %v858 = vadd.f32 %v462, %v730
      %v859 = vadd.f32 %v463, %v731
      %v860 = vadd.f32 %v464, %v732
      %v861 = vadd.f32 %v465, %v733
      %v862 = vadd.f32 %v466, %v734
      %v863 = vadd.f32 %v467, %v735
      %v864 = vadd.f32 %v468, %v736
      %v865 = vadd.f32 %v469, %v737
      %v866 = vadd.f32 %v470, %v738
      %v867 = vadd.f32 %v471, %v739
      %v868 = vadd.f32 %v472, %v740
      %v869 = vadd.f32 %v473, %v741
      %v870 = vadd.f32 %v474, %v742
      %v871 = vadd.f32 %v475, %v743
      %v872 = vadd.f32 %v476, %v744
      %v873 = vadd.f32 %v477, %v745
      %v874 = vadd.f32 %v478, %v746
      %v875 = vadd.f32 %v479, %v747
      %v876 = vadd.f32 %v480, %v748
      %v877 = vadd.f32 %v481, %v749
      %v878 = vadd.f32 %v482, %v750
      %v879 = vadd.f32 %v483, %v751
      %v880 = vadd.f32 %v484, %v752
      %v881 = vadd.f32 %v485, %v753
      %v882 = vadd.f32 %v486, %v754
      %v883 = vadd.f32 %v487, %v755
      %v884 = vadd.f32 %v488, %v756
      %v885 = vadd.f32 %v489, %v757
      %v886 = vadd.f32 %v490, %v758
      %v887 = vadd.f32 %v491, %v759
      %v888 = vadd.f32 %v492, %v760
      %v889 = vadd.f32 %v493, %v761
      %v890 = vadd.f32 %v494, %v762
      %v891 = vadd.f32 %v495, %v763
      %v892 = vadd.f32 %v496, %v764
      %v893 = vadd.f32 %v497, %v765
      %v894 = vadd.f32 %v498, %v766
      %v895 = vadd.f32 %v499, %v767
      %v896 = vadd.f32 %v500, %v768
      %v897 = vadd.f32 %v501, %v769
      %v898 = vadd.f32 %v502, %v770
      %v899 = vadd.f32 %v503, %v771
      %v900 = vadd.f32 %v504, %v772
      %v901 = vadd.f32 %v505, %v773
      %v902 = vadd.f32 %v506, %v774
      %v903 = vadd.f32 %v507, %v775
      %v904 = vadd.f32 %v508, %v776
      %v905 = vadd.f32 %v509, %v777
      %v906 = vadd.f32 %v510, %v778
      %v907 = vadd.f32 %v511, %v779
      %v908 = vadd.f32 %v512, %v780
      %v909 = vadd.f32 %v513, %v781
      %v910 = vadd.f32 %v514, %v782
      %v911 = vadd.f32 %v515, %v783
      %v912 = vadd.f32 %v516, %v784
      %v913 = vadd.f32 %v517, %v785
      %v914 = vadd.f32 %v518, %v786
      %v915 = vadd.f32 %v519, %v787
      %v916 = vadd.f32 %v520, %v788
      %v917 = vadd.f32 %v521, %v789
      %v918 = vadd.f32 %v522, %v790
      %v919 = vadd.f32 %v523, %v791
      %v920 = vadd.f32 %v524, %v792
      %v921 = vadd.f32 %v525, %v793
      %v922 = vadd.f32 %v526, %v794
      %v923 = vadd.f32 %v527, %v795
      %v924 = vadd.f32 %v528, %v796
      %v925 = vadd.f32 %v529, %v797
      %v926 = vadd.f32 %v530, %v798
      %v927 = vadd.f32 %v531, %v799
      %v928 = vadd.f32 %v532, %v800
      %v929 = vadd.f32 %v533, %v801
      %v930 = vadd.f32 %v534, %v802
      %v931 = vadd.f32 %v535, %v803
      %v932 = vadd.f32 %v536, %v804
      %v933 = vadd.f32 %v537, %v805
      %v934 = vadd.f32 %v538, %v806
      %v935 = vadd.f32 %v539, %v807
      %v936 = vadd.f32 %v540, %v808
      %v937 = vadd.f32 %v541, %v809
      %v938 = vadd.f32 %v542, %v810
      %v939 = vadd.f32 %v543, %v811
      %v940 = vadd.f32 %v544, %v812
      %v941 = vadd.f32 %v545, %v813
      %v942 = vadd.f32 %v546, %v814
      %v943 = vadd.f32 %v547, %v815
      %v944 = vadd.f32 %v548, %v816
      %v945 = vadd.f32 %v549, %v817
      %v946 = vadd.f32 %v550, %v818
      %v947 = vadd.f32 %v551, %v819
      %v948 = vadd.f32 %v552, %v820
      %v949 = vadd.f32 %v553, %v821
      %v950 = vadd.f32 %v554, %v822
      %v951 = vadd.f32 %v555, %v823
      %v952 = vadd.f32 %v556, %v824
      %v953 = vadd.f32 %v557, %v825
      %v954 = vadd.f32 %v558, %v826
      %v955 = vadd.f32 %v559, %v827
      %v956 = vadd.f32 %v560, %v828
      %v957 = vld [vmem:[%s2] sm:$0xff]
      %v958 = vld [vmem:[%s2 + $0x8] sm:$0xff]
      %v959 = vld [vmem:[%s2 + $0x10] sm:$0xff]
      %v960 = vld [vmem:[%s2 + $0x18] sm:$0xff]
      %v961 = vld [vmem:[%s2 + $0x20] sm:$0xff]
      %v962 = vld [vmem:[%s2 + $0x28] sm:$0xff]
      %v963 = vld [vmem:[%s2 + $0x30] sm:$0xff]
      %v964 = vld [vmem:[%s2 + $0x38] sm:$0xff]
      %v965 = vld [vmem:[%s2 + $0x40] sm:$0xff]
      %v966 = vld [vmem:[%s2 + $0x48] sm:$0xff]
      %v967 = vld [vmem:[%s2 + $0x50] sm:$0xff]
      %v968 = vld [vmem:[%s2 + $0x58] sm:$0xff]
      %v969 = vld [vmem:[%s2 + $0x60] sm:$0xff]
      %v970 = vld [vmem:[%s2 + $0x68] sm:$0xff]
      %v971 = vld [vmem:[%s2 + $0x70] sm:$0xff]
      %v972 = vld [vmem:[%s2 + $0x78] sm:$0xff]
      %v973 = vld [vmem:[%s2 + $0x80] sm:$0xff]
      %v974 = vld [vmem:[%s2 + $0x88] sm:$0xff]
      %v975 = vld [vmem:[%s2 + $0x90] sm:$0xff]
      %v976 = vld [vmem:[%s2 + $0x98] sm:$0xff]
      %v977 = vld [vmem:[%s2 + $0xa0] sm:$0xff]
      %v978 = vld [vmem:[%s2 + $0xa8] sm:$0xff]
      %v979 = vld [vmem:[%s2 + $0xb0] sm:$0xff]
      %v980 = vld [vmem:[%s2 + $0xb8] sm:$0xff]
      %v981 = vld [vmem:[%s2 + $0xc0] sm:$0xff]
      %v982 = vld [vmem:[%s2 + $0xc8] sm:$0xff]
      %v983 = vld [vmem:[%s2 + $0xd0] sm:$0xff]
      %v984 = vld [vmem:[%s2 + $0xd8] sm:$0xff]
      %v985 = vld [vmem:[%s2 + $0xe0] sm:$0xff]
      %v986 = vld [vmem:[%s2 + $0xe8] sm:$0xff]
      %v987 = vld [vmem:[%s2 + $0xf0] sm:$0xff]
      %v988 = vld [vmem:[%s2 + $0xf8] sm:$0xff]
      %990 = vset.pattern.permute.xlu0 0
      %991 = vperm.xlu0 %990, %v957
      %v992 = vpop.permute.xlu0 %991
      %995 = vset.pattern.permute.xlu0 0
      %996 = vperm.xlu0 %995, %v958
      %v997 = vpop.permute.xlu0 %996
      %1000 = vset.pattern.permute.xlu0 0
      %1001 = vperm.xlu0 %1000, %v959
      %v1002 = vpop.permute.xlu0 %1001
      %1005 = vset.pattern.permute.xlu0 0
      %1006 = vperm.xlu0 %1005, %v960
      %v1007 = vpop.permute.xlu0 %1006
      %1010 = vset.pattern.permute.xlu0 0
      %1011 = vperm.xlu0 %1010, %v961
      %v1012 = vpop.permute.xlu0 %1011
      %1015 = vset.pattern.permute.xlu0 0
      %1016 = vperm.xlu0 %1015, %v962
      %v1017 = vpop.permute.xlu0 %1016
      %1020 = vset.pattern.permute.xlu0 0
      %1021 = vperm.xlu0 %1020, %v963
      %v1022 = vpop.permute.xlu0 %1021
      %1025 = vset.pattern.permute.xlu0 0
      %1026 = vperm.xlu0 %1025, %v964
      %v1027 = vpop.permute.xlu0 %1026
      %1030 = vset.pattern.permute.xlu0 0
      %1031 = vperm.xlu0 %1030, %v965
      %v1032 = vpop.permute.xlu0 %1031
      %1035 = vset.pattern.permute.xlu0 0
      %1036 = vperm.xlu0 %1035, %v966
      %v1037 = vpop.permute.xlu0 %1036
      %1040 = vset.pattern.permute.xlu0 0
      %1041 = vperm.xlu0 %1040, %v967
      %v1042 = vpop.permute.xlu0 %1041
      %1045 = vset.pattern.permute.xlu0 0
      %1046 = vperm.xlu0 %1045, %v968
      %v1047 = vpop.permute.xlu0 %1046
      %1050 = vset.pattern.permute.xlu0 0
      %1051 = vperm.xlu0 %1050, %v969
      %v1052 = vpop.permute.xlu0 %1051
      %1055 = vset.pattern.permute.xlu0 0
      %1056 = vperm.xlu0 %1055, %v970
      %v1057 = vpop.permute.xlu0 %1056
      %1060 = vset.pattern.permute.xlu0 0
      %1061 = vperm.xlu0 %1060, %v971
      %v1062 = vpop.permute.xlu0 %1061
      %1065 = vset.pattern.permute.xlu0 0
      %1066 = vperm.xlu0 %1065, %v972
      %v1067 = vpop.permute.xlu0 %1066
      %1070 = vset.pattern.permute.xlu0 0
      %1071 = vperm.xlu0 %1070, %v973
      %v1072 = vpop.permute.xlu0 %1071
      %1075 = vset.pattern.permute.xlu0 0
      %1076 = vperm.xlu0 %1075, %v974
      %v1077 = vpop.permute.xlu0 %1076
      %1080 = vset.pattern.permute.xlu0 0
      %1081 = vperm.xlu0 %1080, %v975
      %v1082 = vpop.permute.xlu0 %1081
      %1085 = vset.pattern.permute.xlu0 0
      %1086 = vperm.xlu0 %1085, %v976
      %v1087 = vpop.permute.xlu0 %1086
      %1090 = vset.pattern.permute.xlu0 0
      %1091 = vperm.xlu0 %1090, %v977
      %v1092 = vpop.permute.xlu0 %1091
      %1095 = vset.pattern.permute.xlu0 0
      %1096 = vperm.xlu0 %1095, %v978
      %v1097 = vpop.permute.xlu0 %1096
      %1100 = vset.pattern.permute.xlu0 0
      %1101 = vperm.xlu0 %1100, %v979
      %v1102 = vpop.permute.xlu0 %1101
      %1105 = vset.pattern.permute.xlu0 0
      %1106 = vperm.xlu0 %1105, %v980
      %v1107 = vpop.permute.xlu0 %1106
      %1110 = vset.pattern.permute.xlu0 0
      %1111 = vperm.xlu0 %1110, %v981
      %v1112 = vpop.permute.xlu0 %1111
      %1115 = vset.pattern.permute.xlu0 0
      %1116 = vperm.xlu0 %1115, %v982
      %v1117 = vpop.permute.xlu0 %1116
      %1120 = vset.pattern.permute.xlu0 0
      %1121 = vperm.xlu0 %1120, %v983
      %v1122 = vpop.permute.xlu0 %1121
      %1125 = vset.pattern.permute.xlu0 0
      %1126 = vperm.xlu0 %1125, %v984
      %v1127 = vpop.permute.xlu0 %1126
      %1130 = vset.pattern.permute.xlu0 0
      %1131 = vperm.xlu0 %1130, %v985
      %v1132 = vpop.permute.xlu0 %1131
      %1135 = vset.pattern.permute.xlu0 0
      %1136 = vperm.xlu0 %1135, %v986
      %v1137 = vpop.permute.xlu0 %1136
      %1140 = vset.pattern.permute.xlu0 0
      %1141 = vperm.xlu0 %1140, %v987
      %v1142 = vpop.permute.xlu0 %1141
      %1145 = vset.pattern.permute.xlu0 0
      %1146 = vperm.xlu0 %1145, %v988
      %v1147 = vpop.permute.xlu0 %1146
      %v1149 = vadd.f32 %v829, %v992
      %v1150 = vadd.f32 %v830, %v992
      %v1151 = vadd.f32 %v831, %v992
      %v1152 = vadd.f32 %v832, %v992
      %v1153 = vadd.f32 %v833, %v997
      %v1154 = vadd.f32 %v834, %v997
      %v1155 = vadd.f32 %v835, %v997
      %v1156 = vadd.f32 %v836, %v997
      %v1157 = vadd.f32 %v837, %v1002
      %v1158 = vadd.f32 %v838, %v1002
      %v1159 = vadd.f32 %v839, %v1002
      %v1160 = vadd.f32 %v840, %v1002
      %v1161 = vadd.f32 %v841, %v1007
      %v1162 = vadd.f32 %v842, %v1007
      %v1163 = vadd.f32 %v843, %v1007
      %v1164 = vadd.f32 %v844, %v1007
      %v1165 = vadd.f32 %v845, %v1012
      %v1166 = vadd.f32 %v846, %v1012
      %v1167 = vadd.f32 %v847, %v1012
      %v1168 = vadd.f32 %v848, %v1012
      %v1169 = vadd.f32 %v849, %v1017
      %v1170 = vadd.f32 %v850, %v1017
      %v1171 = vadd.f32 %v851, %v1017
      %v1172 = vadd.f32 %v852, %v1017
      %v1173 = vadd.f32 %v853, %v1022
      %v1174 = vadd.f32 %v854, %v1022
      %v1175 = vadd.f32 %v855, %v1022
      %v1176 = vadd.f32 %v856, %v1022
      %v1177 = vadd.f32 %v857, %v1027
      %v1178 = vadd.f32 %v858, %v1027
      %v1179 = vadd.f32 %v859, %v1027
      %v1180 = vadd.f32 %v860, %v1027
      %v1181 = vadd.f32 %v861, %v1032
      %v1182 = vadd.f32 %v862, %v1032
      %v1183 = vadd.f32 %v863, %v1032
      %v1184 = vadd.f32 %v864, %v1032
      %v1185 = vadd.f32 %v865, %v1037
      %v1186 = vadd.f32 %v866, %v1037
      %v1187 = vadd.f32 %v867, %v1037
      %v1188 = vadd.f32 %v868, %v1037
      %v1189 = vadd.f32 %v869, %v1042
      %v1190 = vadd.f32 %v870, %v1042
      %v1191 = vadd.f32 %v871, %v1042
      %v1192 = vadd.f32 %v872, %v1042
      %v1193 = vadd.f32 %v873, %v1047
      %v1194 = vadd.f32 %v874, %v1047
      %v1195 = vadd.f32 %v875, %v1047
      %v1196 = vadd.f32 %v876, %v1047
      %v1197 = vadd.f32 %v877, %v1052
      %v1198 = vadd.f32 %v878, %v1052
      %v1199 = vadd.f32 %v879, %v1052
      %v1200 = vadd.f32 %v880, %v1052
      %v1201 = vadd.f32 %v881, %v1057
      %v1202 = vadd.f32 %v882, %v1057
      %v1203 = vadd.f32 %v883, %v1057
      %v1204 = vadd.f32 %v884, %v1057
      %v1205 = vadd.f32 %v885, %v1062
      %v1206 = vadd.f32 %v886, %v1062
      %v1207 = vadd.f32 %v887, %v1062
      %v1208 = vadd.f32 %v888, %v1062
      %v1209 = vadd.f32 %v889, %v1067
      %v1210 = vadd.f32 %v890, %v1067
      %v1211 = vadd.f32 %v891, %v1067
      %v1212 = vadd.f32 %v892, %v1067
      %v1213 = vadd.f32 %v893, %v1072
      %v1214 = vadd.f32 %v894, %v1072
      %v1215 = vadd.f32 %v895, %v1072
      %v1216 = vadd.f32 %v896, %v1072
      %v1217 = vadd.f32 %v897, %v1077
      %v1218 = vadd.f32 %v898, %v1077
      %v1219 = vadd.f32 %v899, %v1077
      %v1220 = vadd.f32 %v900, %v1077
      %v1221 = vadd.f32 %v901, %v1082
      %v1222 = vadd.f32 %v902, %v1082
      %v1223 = vadd.f32 %v903, %v1082
      %v1224 = vadd.f32 %v904, %v1082
      %v1225 = vadd.f32 %v905, %v1087
      %v1226 = vadd.f32 %v906, %v1087
      %v1227 = vadd.f32 %v907, %v1087
      %v1228 = vadd.f32 %v908, %v1087
      %v1229 = vadd.f32 %v909, %v1092
      %v1230 = vadd.f32 %v910, %v1092
      %v1231 = vadd.f32 %v911, %v1092
      %v1232 = vadd.f32 %v912, %v1092
      %v1233 = vadd.f32 %v913, %v1097
      %v1234 = vadd.f32 %v914, %v1097
      %v1235 = vadd.f32 %v915, %v1097
      %v1236 = vadd.f32 %v916, %v1097
      %v1237 = vadd.f32 %v917, %v1102
      %v1238 = vadd.f32 %v918, %v1102
      %v1239 = vadd.f32 %v919, %v1102
      %v1240 = vadd.f32 %v920, %v1102
      %v1241 = vadd.f32 %v921, %v1107
      %v1242 = vadd.f32 %v922, %v1107
      %v1243 = vadd.f32 %v923, %v1107
      %v1244 = vadd.f32 %v924, %v1107
      %v1245 = vadd.f32 %v925, %v1112
      %v1246 = vadd.f32 %v926, %v1112
      %v1247 = vadd.f32 %v927, %v1112
      %v1248 = vadd.f32 %v928, %v1112
      %v1249 = vadd.f32 %v929, %v1117
      %v1250 = vadd.f32 %v930, %v1117
      %v1251 = vadd.f32 %v931, %v1117
      %v1252 = vadd.f32 %v932, %v1117
      %v1253 = vadd.f32 %v933, %v1122
      %v1254 = vadd.f32 %v934, %v1122
      %v1255 = vadd.f32 %v935, %v1122
      %v1256 = vadd.f32 %v936, %v1122
      %v1257 = vadd.f32 %v937, %v1127
      %v1258 = vadd.f32 %v938, %v1127
      %v1259 = vadd.f32 %v939, %v1127
      %v1260 = vadd.f32 %v940, %v1127
      %v1261 = vadd.f32 %v941, %v1132
      %v1262 = vadd.f32 %v942, %v1132
      %v1263 = vadd.f32 %v943, %v1132
      %v1264 = vadd.f32 %v944, %v1132
      %v1265 = vadd.f32 %v945, %v1137
      %v1266 = vadd.f32 %v946, %v1137
      %v1267 = vadd.f32 %v947, %v1137
      %v1268 = vadd.f32 %v948, %v1137
      %v1269 = vadd.f32 %v949, %v1142
      %v1270 = vadd.f32 %v950, %v1142
      %v1271 = vadd.f32 %v951, %v1142
      %v1272 = vadd.f32 %v952, %v1142
      %v1273 = vadd.f32 %v953, %v1147
      %v1274 = vadd.f32 %v954, %v1147
      %v1275 = vadd.f32 %v955, %v1147
      %v1276 = vadd.f32 %v956, %v1147
      %v1277 = vmax.f32 %v1149, 0.0
      %v1278 = vmax.f32 %v1150, 0.0
      %v1279 = vmax.f32 %v1151, 0.0
      %v1280 = vmax.f32 %v1152, 0.0
      %v1281 = vmax.f32 %v1153, 0.0
      %v1282 = vmax.f32 %v1154, 0.0
      %v1283 = vmax.f32 %v1155, 0.0
      %v1284 = vmax.f32 %v1156, 0.0
      %v1285 = vmax.f32 %v1157, 0.0
      %v1286 = vmax.f32 %v1158, 0.0
      %v1287 = vmax.f32 %v1159, 0.0
      %v1288 = vmax.f32 %v1160, 0.0
      %v1289 = vmax.f32 %v1161, 0.0
      %v1290 = vmax.f32 %v1162, 0.0
      %v1291 = vmax.f32 %v1163, 0.0
      %v1292 = vmax.f32 %v1164, 0.0
      %v1293 = vmax.f32 %v1165, 0.0
      %v1294 = vmax.f32 %v1166, 0.0
      %v1295 = vmax.f32 %v1167, 0.0
      %v1296 = vmax.f32 %v1168, 0.0
      %v1297 = vmax.f32 %v1169, 0.0
      %v1298 = vmax.f32 %v1170, 0.0
      %v1299 = vmax.f32 %v1171, 0.0
      %v1300 = vmax.f32 %v1172, 0.0
      %v1301 = vmax.f32 %v1173, 0.0
      %v1302 = vmax.f32 %v1174, 0.0
      %v1303 = vmax.f32 %v1175, 0.0
      %v1304 = vmax.f32 %v1176, 0.0
      %v1305 = vmax.f32 %v1177, 0.0
      %v1306 = vmax.f32 %v1178, 0.0
      %v1307 = vmax.f32 %v1179, 0.0
      %v1308 = vmax.f32 %v1180, 0.0
      %v1309 = vmax.f32 %v1181, 0.0
      %v1310 = vmax.f32 %v1182, 0.0
      %v1311 = vmax.f32 %v1183, 0.0
      %v1312 = vmax.f32 %v1184, 0.0
      %v1313 = vmax.f32 %v1185, 0.0
      %v1314 = vmax.f32 %v1186, 0.0
      %v1315 = vmax.f32 %v1187, 0.0
      %v1316 = vmax.f32 %v1188, 0.0
      %v1317 = vmax.f32 %v1189, 0.0
      %v1318 = vmax.f32 %v1190, 0.0
      %v1319 = vmax.f32 %v1191, 0.0
      %v1320 = vmax.f32 %v1192, 0.0
      %v1321 = vmax.f32 %v1193, 0.0
      %v1322 = vmax.f32 %v1194, 0.0
      %v1323 = vmax.f32 %v1195, 0.0
      %v1324 = vmax.f32 %v1196, 0.0
      %v1325 = vmax.f32 %v1197, 0.0
      %v1326 = vmax.f32 %v1198, 0.0
      %v1327 = vmax.f32 %v1199, 0.0
      %v1328 = vmax.f32 %v1200, 0.0
      %v1329 = vmax.f32 %v1201, 0.0
      %v1330 = vmax.f32 %v1202, 0.0
      %v1331 = vmax.f32 %v1203, 0.0
      %v1332 = vmax.f32 %v1204, 0.0
      %v1333 = vmax.f32 %v1205, 0.0
      %v1334 = vmax.f32 %v1206, 0.0
      %v1335 = vmax.f32 %v1207, 0.0
      %v1336 = vmax.f32 %v1208, 0.0
      %v1337 = vmax.f32 %v1209, 0.0
      %v1338 = vmax.f32 %v1210, 0.0
      %v1339 = vmax.f32 %v1211, 0.0
      %v1340 = vmax.f32 %v1212, 0.0
      %v1341 = vmax.f32 %v1213, 0.0
      %v1342 = vmax.f32 %v1214, 0.0
      %v1343 = vmax.f32 %v1215, 0.0
      %v1344 = vmax.f32 %v1216, 0.0
      %v1345 = vmax.f32 %v1217, 0.0
      %v1346 = vmax.f32 %v1218, 0.0
      %v1347 = vmax.f32 %v1219, 0.0
      %v1348 = vmax.f32 %v1220, 0.0
      %v1349 = vmax.f32 %v1221, 0.0
      %v1350 = vmax.f32 %v1222, 0.0
      %v1351 = vmax.f32 %v1223, 0.0
      %v1352 = vmax.f32 %v1224, 0.0
      %v1353 = vmax.f32 %v1225, 0.0
      %v1354 = vmax.f32 %v1226, 0.0
      %v1355 = vmax.f32 %v1227, 0.0
      %v1356 = vmax.f32 %v1228, 0.0
      %v1357 = vmax.f32 %v1229, 0.0
      %v1358 = vmax.f32 %v1230, 0.0
      %v1359 = vmax.f32 %v1231, 0.0
      %v1360 = vmax.f32 %v1232, 0.0
      %v1361 = vmax.f32 %v1233, 0.0
      %v1362 = vmax.f32 %v1234, 0.0
      %v1363 = vmax.f32 %v1235, 0.0
      %v1364 = vmax.f32 %v1236, 0.0
      %v1365 = vmax.f32 %v1237, 0.0
      %v1366 = vmax.f32 %v1238, 0.0
      %v1367 = vmax.f32 %v1239, 0.0
      %v1368 = vmax.f32 %v1240, 0.0
      %v1369 = vmax.f32 %v1241, 0.0
      %v1370 = vmax.f32 %v1242, 0.0
      %v1371 = vmax.f32 %v1243, 0.0
      %v1372 = vmax.f32 %v1244, 0.0
      %v1373 = vmax.f32 %v1245, 0.0
      %v1374 = vmax.f32 %v1246, 0.0
      %v1375 = vmax.f32 %v1247, 0.0
      %v1376 = vmax.f32 %v1248, 0.0
      %v1377 = vmax.f32 %v1249, 0.0
      %v1378 = vmax.f32 %v1250, 0.0
      %v1379 = vmax.f32 %v1251, 0.0
      %v1380 = vmax.f32 %v1252, 0.0
      %v1381 = vmax.f32 %v1253, 0.0
      %v1382 = vmax.f32 %v1254, 0.0
      %v1383 = vmax.f32 %v1255, 0.0
      %v1384 = vmax.f32 %v1256, 0.0
      %v1385 = vmax.f32 %v1257, 0.0
      %v1386 = vmax.f32 %v1258, 0.0
      %v1387 = vmax.f32 %v1259, 0.0
      %v1388 = vmax.f32 %v1260, 0.0
      %v1389 = vmax.f32 %v1261, 0.0
      %v1390 = vmax.f32 %v1262, 0.0
      %v1391 = vmax.f32 %v1263, 0.0
      %v1392 = vmax.f32 %v1264, 0.0
      %v1393 = vmax.f32 %v1265, 0.0
      %v1394 = vmax.f32 %v1266, 0.0
      %v1395 = vmax.f32 %v1267, 0.0
      %v1396 = vmax.f32 %v1268, 0.0
      %v1397 = vmax.f32 %v1269, 0.0
      %v1398 = vmax.f32 %v1270, 0.0
      %v1399 = vmax.f32 %v1271, 0.0
      %v1400 = vmax.f32 %v1272, 0.0
      %v1401 = vmax.f32 %v1273, 0.0
      %v1402 = vmax.f32 %v1274, 0.0
      %v1403 = vmax.f32 %v1275, 0.0
      %v1404 = vmax.f32 %v1276, 0.0
      %v1405 = vld [vmem:[%s3] sm:$0x3]
      %s1406 = sld [smem:[#allocation2]]
      %v1407 = vstv %s1406
      %v1409 = vperm.slane %v1405, 0
      %v1410 = vperm.slane %v1405, 1
      %1413 = vmatpush.msra.mxu0 %v1337
      %1414 = vmatpush.msra.mxu0 %v1333
      %1415 = vmatpush.msra.mxu0 %v1329
      %1416 = vmatpush.msra.mxu0 %v1325
      %1417 = vmatpush.msra.mxu0 %v1321
      %1418 = vmatpush.msra.mxu0 %v1317
      %1419 = vmatpush.msra.mxu0 %v1313
      %1420 = vmatpush.msra.mxu0 %v1309
      %1421 = vmatpush.msra.mxu0 %v1305
      %1422 = vmatpush.msra.mxu0 %v1301
      %1423 = vmatpush.msra.mxu0 %v1297
      %1424 = vmatpush.msra.mxu0 %v1293
      %1425 = vmatpush.msra.mxu0 %v1289
      %1426 = vmatpush.msra.mxu0 %v1285
      %1427 = vmatpush.msra.mxu0 %v1281
      %1428 = vmatpush.msra.mxu0 %v1277
      %1429 = vmatmul.f32.gmra.mxu0 %v1409
      %v1430 = vpop.f32.mrf.mxu0
      %v1431 = vadd.f32 %v1407, %v1430
      %1432 = vdwg.mxu0
      %1433 = vmatpush.msra.mxu0 %v1401
      %1434 = vmatpush.msra.mxu0 %v1397
      %1435 = vmatpush.msra.mxu0 %v1393
      %1436 = vmatpush.msra.mxu0 %v1389
      %1437 = vmatpush.msra.mxu0 %v1385
      %1438 = vmatpush.msra.mxu0 %v1381
      %1439 = vmatpush.msra.mxu0 %v1377
      %1440 = vmatpush.msra.mxu0 %v1373
      %1441 = vmatpush.msra.mxu0 %v1369
      %1442 = vmatpush.msra.mxu0 %v1365
      %1443 = vmatpush.msra.mxu0 %v1361
      %1444 = vmatpush.msra.mxu0 %v1357
      %1445 = vmatpush.msra.mxu0 %v1353
      %1446 = vmatpush.msra.mxu0 %v1349
      %1447 = vmatpush.msra.mxu0 %v1345
      %1448 = vmatpush.msra.mxu0 %v1341
      %1449 = vmatmul.f32.gmra.mxu0 %v1410
      %v1450 = vpop.f32.mrf.mxu0
      %v1451 = vadd.f32 %v1431, %v1450
      %1452 = vdwg.mxu0
      %1453 = vmatpush.msra.mxu0 %v1338
      %1454 = vmatpush.msra.mxu0 %v1334
      %1455 = vmatpush.msra.mxu0 %v1330
      %1456 = vmatpush.msra.mxu0 %v1326
      %1457 = vmatpush.msra.mxu0 %v1322
      %1458 = vmatpush.msra.mxu0 %v1318
      %1459 = vmatpush.msra.mxu0 %v1314
      %1460 = vmatpush.msra.mxu0 %v1310
      %1461 = vmatpush.msra.mxu0 %v1306
      %1462 = vmatpush.msra.mxu0 %v1302
      %1463 = vmatpush.msra.mxu0 %v1298
      %1464 = vmatpush.msra.mxu0 %v1294
      %1465 = vmatpush.msra.mxu0 %v1290
      %1466 = vmatpush.msra.mxu0 %v1286
      %1467 = vmatpush.msra.mxu0 %v1282
      %1468 = vmatpush.msra.mxu0 %v1278
      %1469 = vmatmul.f32.gmra.mxu0 %v1409
      %v1470 = vpop.f32.mrf.mxu0
      %v1471 = vadd.f32 %v1407, %v1470
      %1472 = vdwg.mxu0
      %1473 = vmatpush.msra.mxu0 %v1402
      %1474 = vmatpush.msra.mxu0 %v1398
      %1475 = vmatpush.msra.mxu0 %v1394
      %1476 = vmatpush.msra.mxu0 %v1390
      %1477 = vmatpush.msra.mxu0 %v1386
      %1478 = vmatpush.msra.mxu0 %v1382
      %1479 = vmatpush.msra.mxu0 %v1378
      %1480 = vmatpush.msra.mxu0 %v1374
      %1481 = vmatpush.msra.mxu0 %v1370
      %1482 = vmatpush.msra.mxu0 %v1366
      %1483 = vmatpush.msra.mxu0 %v1362
      %1484 = vmatpush.msra.mxu0 %v1358
      %1485 = vmatpush.msra.mxu0 %v1354
      %1486 = vmatpush.msra.mxu0 %v1350
      %1487 = vmatpush.msra.mxu0 %v1346
      %1488 = vmatpush.msra.mxu0 %v1342
      %1489 = vmatmul.f32.gmra.mxu0 %v1410
      %v1490 = vpop.f32.mrf.mxu0
      %v1491 = vadd.f32 %v1471, %v1490
      %1492 = vdwg.mxu0
      %1493 = vmatpush.msra.mxu0 %v1339
      %1494 = vmatpush.msra.mxu0 %v1335
      %1495 = vmatpush.msra.mxu0 %v1331
      %1496 = vmatpush.msra.mxu0 %v1327
      %1497 = vmatpush.msra.mxu0 %v1323
      %1498 = vmatpush.msra.mxu0 %v1319
      %1499 = vmatpush.msra.mxu0 %v1315
      %1500 = vmatpush.msra.mxu0 %v1311
      %1501 = vmatpush.msra.mxu0 %v1307
      %1502 = vmatpush.msra.mxu0 %v1303
      %1503 = vmatpush.msra.mxu0 %v1299
      %1504 = vmatpush.msra.mxu0 %v1295
      %1505 = vmatpush.msra.mxu0 %v1291
      %1506 = vmatpush.msra.mxu0 %v1287
      %1507 = vmatpush.msra.mxu0 %v1283
      %1508 = vmatpush.msra.mxu0 %v1279
      %1509 = vmatmul.f32.gmra.mxu0 %v1409
      %v1510 = vpop.f32.mrf.mxu0
      %v1511 = vadd.f32 %v1407, %v1510
      %1512 = vdwg.mxu0
      %1513 = vmatpush.msra.mxu0 %v1403
      %1514 = vmatpush.msra.mxu0 %v1399
      %1515 = vmatpush.msra.mxu0 %v1395
      %1516 = vmatpush.msra.mxu0 %v1391
      %1517 = vmatpush.msra.mxu0 %v1387
      %1518 = vmatpush.msra.mxu0 %v1383
      %1519 = vmatpush.msra.mxu0 %v1379
      %1520 = vmatpush.msra.mxu0 %v1375
      %1521 = vmatpush.msra.mxu0 %v1371
      %1522 = vmatpush.msra.mxu0 %v1367
      %1523 = vmatpush.msra.mxu0 %v1363
      %1524 = vmatpush.msra.mxu0 %v1359
      %1525 = vmatpush.msra.mxu0 %v1355
      %1526 = vmatpush.msra.mxu0 %v1351
      %1527 = vmatpush.msra.mxu0 %v1347
      %1528 = vmatpush.msra.mxu0 %v1343
      %1529 = vmatmul.f32.gmra.mxu0 %v1410
      %v1530 = vpop.f32.mrf.mxu0
      %v1531 = vadd.f32 %v1511, %v1530
      %1532 = vdwg.mxu0
      %1533 = vmatpush.msra.mxu0 %v1340
      %1534 = vmatpush.msra.mxu0 %v1336
      %1535 = vmatpush.msra.mxu0 %v1332
      %1536 = vmatpush.msra.mxu0 %v1328
      %1537 = vmatpush.msra.mxu0 %v1324
      %1538 = vmatpush.msra.mxu0 %v1320
      %1539 = vmatpush.msra.mxu0 %v1316
      %1540 = vmatpush.msra.mxu0 %v1312
      %1541 = vmatpush.msra.mxu0 %v1308
      %1542 = vmatpush.msra.mxu0 %v1304
      %1543 = vmatpush.msra.mxu0 %v1300
      %1544 = vmatpush.msra.mxu0 %v1296
      %1545 = vmatpush.msra.mxu0 %v1292
      %1546 = vmatpush.msra.mxu0 %v1288
      %1547 = vmatpush.msra.mxu0 %v1284
      %1548 = vmatpush.msra.mxu0 %v1280
      %1549 = vmatmul.f32.gmra.mxu0 %v1409
      %v1550 = vpop.f32.mrf.mxu0
      %v1551 = vadd.f32 %v1407, %v1550
      %1552 = vdwg.mxu0
      %1553 = vmatpush.msra.mxu0 %v1404
      %1554 = vmatpush.msra.mxu0 %v1400
      %1555 = vmatpush.msra.mxu0 %v1396
      %1556 = vmatpush.msra.mxu0 %v1392
      %1557 = vmatpush.msra.mxu0 %v1388
      %1558 = vmatpush.msra.mxu0 %v1384
      %1559 = vmatpush.msra.mxu0 %v1380
      %1560 = vmatpush.msra.mxu0 %v1376
      %1561 = vmatpush.msra.mxu0 %v1372
      %1562 = vmatpush.msra.mxu0 %v1368
      %1563 = vmatpush.msra.mxu0 %v1364
      %1564 = vmatpush.msra.mxu0 %v1360
      %1565 = vmatpush.msra.mxu0 %v1356
      %1566 = vmatpush.msra.mxu0 %v1352
      %1567 = vmatpush.msra.mxu0 %v1348
      %1568 = vmatpush.msra.mxu0 %v1344
      %1569 = vmatmul.f32.gmra.mxu0 %v1410
      %v1570 = vpop.f32.mrf.mxu0
      %v1571 = vadd.f32 %v1551, %v1570
      %1572 = vdwg.mxu0
      %v1577 = vrot.slane %v1491, 7
      %v1578 = vrot.slane %v1531, 6
      %v1579 = vrot.slane %v1571, 5
      %vm1580 = vcmask 1040384
      %v1581 = vsel %vm1580, %v1451, %v1577
      %vm1582 = vcmask 1042434
      %v1583 = vsel %vm1582, %v1578, %v1579
      %vm1584 = vcmask 1041408
      %v1585 = vsel %vm1584, %v1581, %v1583
      %v1587 = vlaneseq
      %vm1588 = vcmp.ge.s32.totalorder %v1587, 0
      %vm1589 = vcmp.lt.s32.totalorder %v1587, 512
      %vm1590 = vmand %vm1588, %vm1589
      %1591 = vst.msk [vmem:[%s225] sm:$0xf] %vm1590, %v1585
      %s1592 = smul.u32 4, %s17
      %p1593 = scmp.lt.s32.totalorder %s1592, 7
      %s1594 = scalar_select %p1593, %s1592, 7
      %s1595 = scalar_lea.vmem %s5, %s1594
      // Predicated region
      $region41: #{mlp_b_forward.1} parent=39 // pred_check
        %p1596 = pneg %p145
      $region42: #{mlp_b_forward.1} parent=39 // pred_check_branch
        %1598 = sbr.rel (%p1596) target = $region44
      $region43: #{mlp_b_forward.1} parent=39 // pred_region
        %s1599 = smul.u32 4, %s17
      $region44: #{mlp_b_forward.1} parent=39 // pred_fallthru
        _
    $region40: #{mlp_b_forward.1} parent=5 // pred_fallthru
      _
    %p1600 = scmp.le.s32.totalorder 2, %s12
    // Predicated region
    $region45: #{mlp_b_forward.1} parent=5 // pred_check
      %p1601 = pneg %p1600
    $region46: #{mlp_b_forward.1} parent=5 // pred_check_branch
      %1603 = sbr.rel (%p1601) target = $region48
    $region47: #{mlp_b_forward.1} parent=5 // pred_region
      %s1604 = ssub.s32 %s12, 2
      // Predicated region
      $region49: #{mlp_b_forward.1} parent=47 // pred_check
        %p1605 = pneg %p151
      $region50: #{mlp_b_forward.1} parent=47 // pred_check_branch
        %1607 = sbr.rel (%p1605) target = $region52
      $region51: #{mlp_b_forward.1} parent=47 // pred_region
        %s1608 = smul.u32 4, %s18
        %p1609 = scmp.lt.s32.totalorder %s1608, 7
        %s1610 = scalar_select %p1609, %s1608, 7
        %s1611 = scalar_lea.vmem %s5, %s1610
      $region52: #{mlp_b_forward.1} parent=47 // pred_fallthru
        _
    $region48: #{mlp_b_forward.1} parent=5 // pred_fallthru
      _
  $region6: #{mlp_b_forward.1} parent=0 // loop_footer
    %s16 = sadd.s32 1, %s12
  $region7: #{mlp_b_forward.1} parent=0 // loop_footer_branch
    %11 = sbr.rel target = $region3
  $region8: #{mlp_b_forward.1} parent=0 // loop_exit
    _

</llo_original>
